<compile_context>
chip_gen: v7x
topology: tpu7x:2x2x1
jax: 0.10.0
libtpu: 0.0.40
codegen_flags: <defaults>
</compile_context>

<pallas_src>
import math

import jax
import jax.numpy as jnp
from jax.experimental import pallas as pl
from jax.experimental.pallas import tpu as pltpu

_MIB = 1024 * 1024
_VMEM_TILE_BUDGET = 24 * _MIB   # target tile footprint per pass
_VMEM_LIMIT_BYTES = 32 * _MIB   # explicit scoped-VMEM limit (safe v5e/v6e/v7x)


def _round_up(x, m):
    return ((x + m - 1) // m) * m


# ---------------------------------------------------------------------------
# Kernel 1: feature transform  xw[b] = x[b] @ W   (per node-row tile)
# ---------------------------------------------------------------------------
def _xw_kernel(x_ref, w_ref, xw_ref):
    # x_ref: (B, tn, in_dim)   w_ref: (in_dim, od_p)   xw_ref: (B, tn, od_p)
    w = w_ref[...]
    for b in range(x_ref.shape[0]):   # static unroll; B is small for GCNs
        # od_p is a multiple of 128 -> each band store is full-lane, unmasked.
        xw_ref[b] = jnp.dot(x_ref[b], w, preferred_element_type=jnp.float32)


# ---------------------------------------------------------------------------
# Kernel 2: aggregation  out = leaky_relu(adj @ xw, 0.2)
# Accumulates in place in the f32 output block (resident across K; no scratch).
# ---------------------------------------------------------------------------
def _agg_kernel(adj_ref, xw_ref, o_ref):
    # adj_ref: (tm, tk)   xw_ref: (B, tk, od_p)   o_ref: (B, tm, od_p) f32
    @pl.when(pl.program_id(1) == 0)
    def _():
        o_ref[...] = jnp.zeros_like(o_ref)

    adj = adj_ref[...]
    for b in range(xw_ref.shape[0]):  # static unroll; adj is batch-shared
        o_ref[b] += jnp.dot(adj, xw_ref[b], preferred_element_type=jnp.float32)

    @pl.when(pl.program_id(1) == pl.num_programs(1) - 1)
    def _():
        axw = o_ref[...]
        o_ref[...] = jnp.where(axw > 0, axw, 0.2 * axw)


# ---------------------------------------------------------------------------
# Tile selection (VMEM-budget aware)
# ---------------------------------------------------------------------------
def _agg_tiles(n, b, od_p, budget=_VMEM_TILE_BUDGET):
    """Pick (tm, tk, n_padded) for the aggregation pass.

    Footprint model (f32; double-buffered streamed inputs + resident output):
        4 * (2*tm*tk + 2*B*tk*od_p + 2*B*tm*od_p)  <=  budget
    """
    def fp(tm, tk):
        return 4 * (2 * tm * tk + 2 * b * tk * od_p + 2 * b * tm * od_p)

    if n <= 512 and fp(n, n) <= budget:
        tm = n
        if n >= 256 and n % 16 == 0:
            tm = n // 2            # >=2 row tiles so v7x megacore gets work
        return tm, n, n            # full-dim blocks: always layout-legal

    # Tiled path: lane/MXU-aligned power-of-two tiles, shrunk to the budget.
    t = 512
    while t > 128 and fp(t, t) > budget:
        t //= 2
    tm = tk = t
    while tm > 8 and fp(tm, tk) > budget:
        tm //= 2                   # very wide lanes: shrink row tile only
    n_p = _round_up(n, tk)         # tm | tk | n_p (powers of two)
    if fp(tm, n_p) <= budget:
        tk = n_p                   # whole xw K-extent fits: loaded once, resident
    return tm, tk, n_p


def _xw_tile(n_p, tm, b, in_dim, od_p, budget=_VMEM_TILE_BUDGET):
    def fp(tn):
        return 4 * (2 * b * tn * in_dim + 2 * in_dim * od_p + 2 * b * tn * od_p)

    tn = tm
    while fp(tn) > budget and tn % 16 == 0 and n_p % (tn // 2) == 0:
        tn //= 2
    return tn


# ---------------------------------------------------------------------------
# Wrapper
# ---------------------------------------------------------------------------
def gcn_conv(x, adj, w):
    """x: [B, N, in_dim] f32, adj: [N, N] f32, w: [in_dim, out_dim] f32."""
    B, N, in_dim = x.shape
    out_dim = w.shape[1]

    # Lane-pad the output feature dim (biggest measured lever: unmasked stores
    # + full MXU lane width).  Zero columns of W stay zero all the way through.
    od_p = _round_up(out_dim, 128)
    if od_p != out_dim:
        w = jnp.pad(w, ((0, 0), (0, od_p - out_dim)))

    tm, tk, n_p = _agg_tiles(N, B, od_p)
    if n_p != N:
        # Zero padding is exact: padded adj columns/rows contribute nothing and
        # the padded output rows are sliced off below.
        x = jnp.pad(x, ((0, 0), (0, n_p - N), (0, 0)))
        adj = jnp.pad(adj, ((0, n_p - N), (0, n_p - N)))

    def _params(sem):
        return pltpu.CompilerParams(dimension_semantics=sem,
                                    vmem_limit_bytes=_VMEM_LIMIT_BYTES)

    # ---- Pass 1: xw[b] = x[b] @ W  ----------------------------------------
    tn = _xw_tile(n_p, tm, B, in_dim, od_p)
    xw = pl.pallas_call(
        _xw_kernel,
        out_shape=jax.ShapeDtypeStruct((B, n_p, od_p), jnp.float32),
        grid_spec=pltpu.PrefetchScalarGridSpec(
            num_scalar_prefetch=0,
            grid=(n_p // tn,),
            in_specs=[
                pl.BlockSpec((B, tn, in_dim), lambda i: (0, i, 0)),
                pl.BlockSpec((in_dim, od_p), lambda i: (0, 0)),
            ],
            out_specs=pl.BlockSpec((B, tn, od_p), lambda i: (0, i, 0)),
        ),
        compiler_params=_params(("parallel",)),
    )(x, w)

    # ---- Pass 2: out = leaky_relu(adj @ xw)  -------------------------------
    out = pl.pallas_call(
        _agg_kernel,
        out_shape=jax.ShapeDtypeStruct((B, n_p, od_p), jnp.float32),
        grid_spec=pltpu.PrefetchScalarGridSpec(
            num_scalar_prefetch=0,
            grid=(n_p // tm, n_p // tk),             # K (reduction) last
            in_specs=[
                pl.BlockSpec((tm, tk), lambda i, k: (i, k)),          # adj tile
                pl.BlockSpec((B, tk, od_p), lambda i, k: (0, k, 0)),  # xw tile
            ],
            out_specs=pl.BlockSpec((B, tm, od_p), lambda i, k: (0, i, 0)),
        ),
        compiler_params=_params(("parallel", "arbitrary")),
    )(adj, xw)

    if n_p != N or od_p != out_dim:
        out = out[:, :N, :out_dim]
    return out


def reference(x, adj, w):
    axw = jnp.einsum("nm,bmd->bnd", adj, x) @ w
    return jnp.where(axw > 0, axw, 0.2 * axw)


if __name__ == "__main__":
    B, N, in_dim, out_dim = 2, 16, 32, 32

    key = jax.random.PRNGKey(0)
    kx, ka, kw = jax.random.split(key, 3)

    x = jax.random.normal(kx, (B, N, in_dim), dtype=jnp.float32)

    # Symmetrically-normalized adjacency (deterministic, built in-script).
    a = (jax.random.uniform(ka, (N, N)) > 0.5).astype(jnp.float32)
    a = jnp.maximum(a, a.T) + jnp.eye(N, dtype=jnp.float32)
    a = jnp.minimum(a, 1.0)
    deg_inv_sqrt = 1.0 / jnp.sqrt(a.sum(axis=-1))
    adj = deg_inv_sqrt[:, None] * a * deg_inv_sqrt[None, :]

    # Kaiming-uniform init (nonlinearity='relu'): bound = sqrt(2)*sqrt(3/fan_in)
    fan_in = out_dim  # PyTorch fan_in for a 2D [in_dim, out_dim] tensor is size(1)
    bound = math.sqrt(2.0) * math.sqrt(3.0 / fan_in)
    w = jax.random.uniform(kw, (in_dim, out_dim), dtype=jnp.float32,
                           minval=-bound, maxval=bound)

    out = gcn_conv(x, adj, w)
    out = jax.block_until_ready(out)

    ref = reference(x, adj, w)
    assert out.shape == (B, N, out_dim)
    assert jnp.allclose(out, ref, atol=1e-4, rtol=1e-4)

    print("KERNEL_OK")
</pallas_src>

<mosaic_0001>
module attributes {stable_mosaic.version = 11 : i64} {
  func.func @_xw_kernel(%arg0: i32, %arg1: memref<2x16x32xf32, #tpu.memory_space<vmem>>, %arg2: memref<32x128xf32, #tpu.memory_space<vmem>>, %arg3: memref<2x16x128xf32, #tpu.memory_space<vmem>>) attributes {dimension_semantics = [#tpu.dimension_semantics<parallel>], iteration_bounds = array<i64: 1>, scalar_prefetch = 0 : i64, scratch_operands = 0 : i64, tpu.core_type = #tpu.core_type<tc>, window_params = [{transform_indices = @transform_0, window_bounds = array<i64: 2, 16, 32>}, {pipeline_mode = #tpu.pipeline_mode<synchronous>, transform_indices = @transform_1, window_bounds = array<i64: 32, 128>}, {transform_indices = @transform_2, window_bounds = array<i64: 2, 16, 128>}]} {
    %c0 = arith.constant 0 : index
    %c0_0 = arith.constant 0 : index
    %0 = vector.load %arg2[%c0, %c0_0] : memref<32x128xf32, #tpu.memory_space<vmem>>, vector<32x128xf32>
    %c0_1 = arith.constant 0 : index
    %c0_2 = arith.constant 0 : index
    %c0_3 = arith.constant 0 : index
    %1 = vector.load %arg1[%c0_1, %c0_2, %c0_3] : memref<2x16x32xf32, #tpu.memory_space<vmem>>, vector<1x16x32xf32>
    %2 = vector.shape_cast %1 : vector<1x16x32xf32> to vector<16x32xf32>
    %cst = arith.constant dense<0.000000e+00> : vector<16x128xf32>
    %3 = tpu.matmul %2, %0, %cst {dimension_numbers = #tpu.dot_dimension_numbers<[1], [0], [0], [1], [0, 0, 1, 1], [], []>} : vector<16x32xf32>, vector<32x128xf32>, vector<16x128xf32> -> vector<16x128xf32>
    %c0_4 = arith.constant 0 : index
    %c0_5 = arith.constant 0 : index
    %c0_6 = arith.constant 0 : index
    %4 = vector.load %arg3[%c0_4, %c0_5, %c0_6] : memref<2x16x128xf32, #tpu.memory_space<vmem>>, vector<1x16x128xf32>
    %5 = vector.shape_cast %4 : vector<1x16x128xf32> to vector<16x128xf32>
    %6 = vector.shape_cast %3 : vector<16x128xf32> to vector<1x16x128xf32>
    tpu.vector_store %arg3[%c0_4, %c0_5, %c0_6], %6 {strides = array<i32>} : memref<2x16x128xf32, #tpu.memory_space<vmem>>, vector<1x16x128xf32>,
    %c1 = arith.constant 1 : index
    %c0_7 = arith.constant 0 : index
    %c0_8 = arith.constant 0 : index
    %7 = vector.load %arg1[%c1, %c0_7, %c0_8] : memref<2x16x32xf32, #tpu.memory_space<vmem>>, vector<1x16x32xf32>
    %8 = vector.shape_cast %7 : vector<1x16x32xf32> to vector<16x32xf32>
    %cst_9 = arith.constant dense<0.000000e+00> : vector<16x128xf32>
    %9 = tpu.matmul %8, %0, %cst_9 {dimension_numbers = #tpu.dot_dimension_numbers<[1], [0], [0], [1], [0, 0, 1, 1], [], []>} : vector<16x32xf32>, vector<32x128xf32>, vector<16x128xf32> -> vector<16x128xf32>
    %c1_10 = arith.constant 1 : index
    %c0_11 = arith.constant 0 : index
    %c0_12 = arith.constant 0 : index
    %10 = vector.load %arg3[%c1_10, %c0_11, %c0_12] : memref<2x16x128xf32, #tpu.memory_space<vmem>>, vector<1x16x128xf32>
    %11 = vector.shape_cast %10 : vector<1x16x128xf32> to vector<16x128xf32>
    %12 = vector.shape_cast %9 : vector<16x128xf32> to vector<1x16x128xf32>
    tpu.vector_store %arg3[%c1_10, %c0_11, %c0_12], %12 {strides = array<i32>} : memref<2x16x128xf32, #tpu.memory_space<vmem>>, vector<1x16x128xf32>,
    return
  }
  func.func @transform_0(%arg0: i32) -> (i32, i32, i32) {
    %c0_i32 = arith.constant 0 : i32
    %c0_i32_0 = arith.constant 0 : i32
    %c0_i32_1 = arith.constant 0 : i32
    return %c0_i32, %arg0, %c0_i32_0 : i32, i32, i32
  }
  func.func @transform_1(%arg0: i32) -> (i32, i32) {
    %c0_i32 = arith.constant 0 : i32
    %c0_i32_0 = arith.constant 0 : i32
    %c0_i32_1 = arith.constant 0 : i32
    return %c0_i32, %c0_i32_0 : i32, i32
  }
  func.func @transform_2(%arg0: i32) -> (i32, i32, i32) {
    %c0_i32 = arith.constant 0 : i32
    %c0_i32_0 = arith.constant 0 : i32
    %c0_i32_1 = arith.constant 0 : i32
    return %c0_i32, %arg0, %c0_i32_0 : i32, i32, i32
  }
}

</mosaic_0001>

<llo_original>
// kernel: tpu_custom_call.1
$region0: #{tpu_custom_call.1}
  #allocation0 [shape = 'u32[]', space=smem, size = 0x4, offset = 0x4, fixed_abs, tag = 'smem constant byte address 0x4 - core index']
  #allocation1 [shape = 'u32[144,128]{1,0:T(1,128)}', space=vmem, size = 0x12000, scoped, tag = 'internal scratch']
  %s0 = inlined_call_operand.hbm [shape: f32[2,16,32], index: 0, kind: input, shape index: {}]
  %s1 = inlined_call_operand.hbm [shape: f32[32,128], index: 1, kind: input, shape index: {}]
  %s2 = inlined_call_operand.hbm [shape: f32[2,16,128], index: 2, kind: output, shape index: {}]
  %s3 = sld [smem:[#allocation0]]
  $region26: #{tpu_custom_call.1} parent=0
    _
  %s5 = ssub.s32 1, %s3
  %s6 = scalar_select 0, %s5, %s3
  $region1: #{tpu_custom_call.1} parent=0
    #allocation2 [shape = 'u8[16384]{0}', space=vmem, size = 0x4000, scoped, tag = 'input window, operand 0, single buffered']
    #allocation3 [shape = 's32[1]{0}', space=sflag, size = 0x4, scoped, tag = 'scoped memory for tpu_custom_call.1']
    #allocation4 [shape = 's32[1]{0}', space=sflag, size = 0x4, scoped, tag = 'scoped memory for tpu_custom_call.1']
    #allocation5 [shape = 'u8[16384]{0}', space=vmem, size = 0x4000, scoped, tag = 'input window, operand 1, single buffered']
    #allocation6 [shape = 's32[1]{0}', space=sflag, size = 0x4, scoped, tag = 'scoped memory for tpu_custom_call.1']
    #allocation7 [shape = 'u8[16384]{0}', space=vmem, size = 0x4000, scoped, tag = 'output window, operand 0, single buffered']
    %7 = vsyncpa [#allocation3], 0
    %8 = vsyncpa [#allocation6], 0
    %9 = vsyncpa [#allocation4], 0
    // Predicated region
    $region2: #{tpu_custom_call.1} parent=1 // pred_check
      _
    $region3: #{tpu_custom_call.1} parent=1 // pred_check_branch
      %11 = sbr.rel (0) target = $region5
    $region4: #{tpu_custom_call.1} parent=1 // pred_region
      %s13 = ssub.s32 512, 512
      %14 = vsyncadd [#allocation3], %s13
      %s15 = sshll.u32 [#allocation2], 4
      %s16 = int_to_ptr.vmem [resolvable:$true] %s15
      %21 = dma.hbm_to_vmem [thread:$0]  %s0, 512, %s16, [#allocation3], 128, 128, 8
    $region5: #{tpu_custom_call.1} parent=1 // pred_fallthru
      _
    // Predicated region
    $region6: #{tpu_custom_call.1} parent=1 // pred_check
      _
    $region7: #{tpu_custom_call.1} parent=1 // pred_check_branch
      %23 = sbr.rel (0) target = $region9
    $region8: #{tpu_custom_call.1} parent=1 // pred_region
      %s25 = ssub.s32 512, 512
      %26 = vsyncadd [#allocation6], %s25
      %s27 = sshll.u32 [#allocation5], 4
      %s28 = int_to_ptr.vmem [resolvable:$true] %s27
      %33 = dma.hbm_to_vmem [thread:$0]  %s1, 512, %s28, [#allocation6], 128, 128, 8
    $region9: #{tpu_custom_call.1} parent=1 // pred_fallthru
      _
    // Predicated region
    $region10: #{tpu_custom_call.1} parent=1 // pred_check
      _
    $region11: #{tpu_custom_call.1} parent=1 // pred_check_branch
      %35 = sbr.rel (0) target = $region13
    $region12: #{tpu_custom_call.1} parent=1 // pred_region
      %36 = dma.done [#allocation3], 512
    $region13: #{tpu_custom_call.1} parent=1 // pred_fallthru
      _
    // Predicated region
    $region14: #{tpu_custom_call.1} parent=1 // pred_check
      _
    $region15: #{tpu_custom_call.1} parent=1 // pred_check_branch
      %38 = sbr.rel (0) target = $region17
    $region16: #{tpu_custom_call.1} parent=1 // pred_region
      %39 = dma.done [#allocation6], 512
    $region17: #{tpu_custom_call.1} parent=1 // pred_fallthru
      _
    %v40 = vld [vmem:[#allocation5] sm:$0xff]
    %v41 = vld [vmem:[#allocation5 + $0x8] sm:$0xff]
    %v42 = vld [vmem:[#allocation5 + $0x10] sm:$0xff]
    %v43 = vld [vmem:[#allocation5 + $0x18] sm:$0xff]
    %v44 = vld [vmem:[#allocation2] sm:$0xff]
    %v45 = vld [vmem:[#allocation2 + $0x8] sm:$0xff]
    %vm46 = vcmask 261120
    %v48 = vsel %vm46, %v44, 0
    %v51 = vsel %vm46, %v45, 0
    %53 = vmatprep.subr.mxu0 0.0
    %54 = vmatpush1.msra.mxu0 %v40
    %55 = vmatprep.subr.mxu0 0.0
    %56 = vmatpush1.msra.mxu0 %v41
    %57 = vmatprep.subr.mxu0 0.0
    %58 = vmatpush1.msra.mxu0 %v42
    %59 = vmatprep.subr.mxu0 0.0
    %60 = vmatpush1.msra.mxu0 %v43
    %61 = vmatprep.subr.mxu0 0.0
    %62 = vmatpush1.msra.mxu0 0.0
    %63 = vmatprep.subr.mxu0 0.0
    %64 = vmatpush1.msra.mxu0 0.0
    %65 = vmatprep.subr.mxu0 0.0
    %66 = vmatpush1.msra.mxu0 0.0
    %67 = vmatprep.subr.mxu0 0.0
    %68 = vmatpush1.msra.mxu0 0.0
    %69 = vmatprep.subr.mxu0 0.0
    %70 = vmatpush1.msra.mxu0 0.0
    %71 = vmatprep.subr.mxu0 0.0
    %72 = vmatpush1.msra.mxu0 0.0
    %73 = vmatprep.subr.mxu0 0.0
    %74 = vmatpush1.msra.mxu0 0.0
    %75 = vmatprep.subr.mxu0 0.0
    %76 = vmatpush1.msra.mxu0 0.0
    %77 = vmatprep.subr.mxu0 0.0
    %78 = vmatpush1.msra.mxu0 0.0
    %79 = vmatprep.subr.mxu0 0.0
    %80 = vmatpush1.msra.mxu0 0.0
    %81 = vmatprep.subr.mxu0 0.0
    %82 = vmatpush1.msra.mxu0 0.0
    %83 = vmatprep.subr.mxu0 0.0
    %84 = vmatpush1.msra.mxu0 0.0
    %85 = vmatprep.subr.mxu0 0.0
    %86 = vmatpush1.msra.mxu0 0.0
    %87 = vmatprep.subr.mxu0 0.0
    %88 = vmatpush1.msra.mxu0 0.0
    %89 = vmatprep.subr.mxu0 0.0
    %90 = vmatpush1.msra.mxu0 0.0
    %91 = vmatprep.subr.mxu0 0.0
    %92 = vmatpush1.msra.mxu0 0.0
    %93 = vmatprep.subr.mxu0 0.0
    %94 = vmatpush1.msra.mxu0 0.0
    %95 = vmatprep.subr.mxu0 0.0
    %96 = vmatpush1.msra.mxu0 0.0
    %97 = vmatprep.subr.mxu0 0.0
    %98 = vmatpush1.msra.mxu0 0.0
    %99 = vmatprep.subr.mxu0 0.0
    %100 = vmatpush1.msra.mxu0 0.0
    %101 = vmatprep.subr.mxu0 0.0
    %102 = vmatpush1.msra.mxu0 0.0
    %103 = vmatprep.subr.mxu0 0.0
    %104 = vmatpush1.msra.mxu0 0.0
    %105 = vmatprep.subr.mxu0 0.0
    %106 = vmatpush1.msra.mxu0 0.0
    %107 = vmatprep.subr.mxu0 0.0
    %108 = vmatpush1.msra.mxu0 0.0
    %109 = vmatprep.subr.mxu0 0.0
    %110 = vmatpush1.msra.mxu0 0.0
    %111 = vmatprep.subr.mxu0 0.0
    %112 = vmatpush1.msra.mxu0 0.0
    %113 = vmatprep.subr.mxu0 0.0
    %114 = vmatpush1.msra.mxu0 0.0
    %115 = vmatprep.subr.mxu0 0.0
    %116 = vmatpush1.msra.mxu0 0.0
    %117 = vmatprep.mubr.f32.mxu0 0.0
    %118 = vmatmul.mubr.f32.gmra.mrb[0].mxu0 %v48
    %v119 = vpop.f32.mrb[0].mxu0
    %v120 = vadd.f32 0.0, %v119
    %v121 = vpop.f32.mrb[0].mxu0
    %122 = vmatprep.mubr.f32.mxu0 0.0
    %123 = vmatmul.mubr.f32.gmra.mrb[0].mxu0 %v51
    %v124 = vpop.f32.mrb[0].mxu0
    %v125 = vadd.f32 0.0, %v124
    %v126 = vpop.f32.mrb[0].mxu0
    %127 = vdwg.mxu0
    %128 = vst [vmem:[#allocation7] sm:$0xff] %v120
    %129 = vst [vmem:[#allocation7 + $0x8] sm:$0xff] %v125
    %s130 = scalar_lea.vmem [#allocation2], 16
    %v131 = vld [vmem:[%s130] sm:$0xff]
    %v132 = vld [vmem:[%s130 + $0x8] sm:$0xff]
    %v134 = vsel %vm46, %v131, 0
    %v137 = vsel %vm46, %v132, 0
    %139 = vmatprep.subr.mxu0 0.0
    %140 = vmatpush1.msra.mxu0 %v40
    %141 = vmatprep.subr.mxu0 0.0
    %142 = vmatpush1.msra.mxu0 %v41
    %143 = vmatprep.subr.mxu0 0.0
    %144 = vmatpush1.msra.mxu0 %v42
    %145 = vmatprep.subr.mxu0 0.0
    %146 = vmatpush1.msra.mxu0 %v43
    %147 = vmatprep.subr.mxu0 0.0
    %148 = vmatpush1.msra.mxu0 0.0
    %149 = vmatprep.subr.mxu0 0.0
    %150 = vmatpush1.msra.mxu0 0.0
    %151 = vmatprep.subr.mxu0 0.0
    %152 = vmatpush1.msra.mxu0 0.0
    %153 = vmatprep.subr.mxu0 0.0
    %154 = vmatpush1.msra.mxu0 0.0
    %155 = vmatprep.subr.mxu0 0.0
    %156 = vmatpush1.msra.mxu0 0.0
    %157 = vmatprep.subr.mxu0 0.0
    %158 = vmatpush1.msra.mxu0 0.0
    %159 = vmatprep.subr.mxu0 0.0
    %160 = vmatpush1.msra.mxu0 0.0
    %161 = vmatprep.subr.mxu0 0.0
    %162 = vmatpush1.msra.mxu0 0.0
    %163 = vmatprep.subr.mxu0 0.0
    %164 = vmatpush1.msra.mxu0 0.0
    %165 = vmatprep.subr.mxu0 0.0
    %166 = vmatpush1.msra.mxu0 0.0
    %167 = vmatprep.subr.mxu0 0.0
    %168 = vmatpush1.msra.mxu0 0.0
    %169 = vmatprep.subr.mxu0 0.0
    %170 = vmatpush1.msra.mxu0 0.0
    %171 = vmatprep.subr.mxu0 0.0
    %172 = vmatpush1.msra.mxu0 0.0
    %173 = vmatprep.subr.mxu0 0.0
    %174 = vmatpush1.msra.mxu0 0.0
    %175 = vmatprep.subr.mxu0 0.0
    %176 = vmatpush1.msra.mxu0 0.0
    %177 = vmatprep.subr.mxu0 0.0
    %178 = vmatpush1.msra.mxu0 0.0
    %179 = vmatprep.subr.mxu0 0.0
    %180 = vmatpush1.msra.mxu0 0.0
    %181 = vmatprep.subr.mxu0 0.0
    %182 = vmatpush1.msra.mxu0 0.0
    %183 = vmatprep.subr.mxu0 0.0
    %184 = vmatpush1.msra.mxu0 0.0
    %185 = vmatprep.subr.mxu0 0.0
    %186 = vmatpush1.msra.mxu0 0.0
    %187 = vmatprep.subr.mxu0 0.0
    %188 = vmatpush1.msra.mxu0 0.0
    %189 = vmatprep.subr.mxu0 0.0
    %190 = vmatpush1.msra.mxu0 0.0
    %191 = vmatprep.subr.mxu0 0.0
    %192 = vmatpush1.msra.mxu0 0.0
    %193 = vmatprep.subr.mxu0 0.0
    %194 = vmatpush1.msra.mxu0 0.0
    %195 = vmatprep.subr.mxu0 0.0
    %196 = vmatpush1.msra.mxu0 0.0
    %197 = vmatprep.subr.mxu0 0.0
    %198 = vmatpush1.msra.mxu0 0.0
    %199 = vmatprep.subr.mxu0 0.0
    %200 = vmatpush1.msra.mxu0 0.0
    %201 = vmatprep.subr.mxu0 0.0
    %202 = vmatpush1.msra.mxu0 0.0
    %203 = vmatprep.mubr.f32.mxu0 0.0
    %204 = vmatmul.mubr.f32.gmra.mrb[0].mxu0 %v134
    %v205 = vpop.f32.mrb[0].mxu0
    %v206 = vadd.f32 0.0, %v205
    %v207 = vpop.f32.mrb[0].mxu0
    %208 = vmatprep.mubr.f32.mxu0 0.0
    %209 = vmatmul.mubr.f32.gmra.mrb[0].mxu0 %v137
    %v210 = vpop.f32.mrb[0].mxu0
    %v211 = vadd.f32 0.0, %v210
    %v212 = vpop.f32.mrb[0].mxu0
    %213 = vdwg.mxu0
    %s214 = scalar_lea.vmem [#allocation7], 16
    %215 = vst [vmem:[%s214] sm:$0xff] %v206
    %216 = vst [vmem:[%s214 + $0x8] sm:$0xff] %v211
    // Predicated region
    $region18: #{tpu_custom_call.1} parent=1 // pred_check
      _
    $region19: #{tpu_custom_call.1} parent=1 // pred_check_branch
      %218 = sbr.rel (0) target = $region21
    $region20: #{tpu_custom_call.1} parent=1 // pred_region
      %s220 = ssub.s32 512, 512
      %221 = vsyncadd [#allocation4], %s220
      %s222 = sshll.u32 [#allocation7], 4
      %s223 = int_to_ptr.vmem [resolvable:$true] %s222
      %228 = dma.vmem_to_hbm [thread:$0]  %s223, 512, %s2, [#allocation4], 128, 128, 8
    $region21: #{tpu_custom_call.1} parent=1 // pred_fallthru
      _
    // Predicated region
    $region22: #{tpu_custom_call.1} parent=1 // pred_check
      _
    $region23: #{tpu_custom_call.1} parent=1 // pred_check_branch
      %230 = sbr.rel (0) target = $region25
    $region24: #{tpu_custom_call.1} parent=1 // pred_region
      %231 = dma.done [#allocation4], 512
    $region25: #{tpu_custom_call.1} parent=1 // pred_fallthru
      _
    %232 = vsyncpa [#allocation3], 1
    %233 = vsyncpa [#allocation6], 1
    %234 = vsyncpa [#allocation4], 1

</llo_original>
